<compile_context>
chip_gen: v7x
topology: tpu7x:2x2x1
jax: 0.10.0
libtpu: 0.0.40
codegen_flags: <defaults>
</compile_context>

<pallas_src>
from functools import partial

import jax
import jax.numpy as jnp
from jax.experimental import pallas as pl
from jax.experimental.pallas import tpu as pltpu


def _round_up(x, m):
    return ((x + m - 1) // m) * m


def _auto_tile_rows(n):
    # Big tiles amortize the ~0.35 us/step grid overhead; this kernel is a
    # pure stream and per-step VMEM at tile=1024 is ~1.5 MiB, tiny on every
    # generation (incl. v7x's 64 MiB).  Small N collapses to one tile (no
    # benefit from extra grid steps on 1-TC v5e/v6e); large N has many tiles
    # so both v7x TensorCores still get work via the "parallel" axis.
    if n <= 1024:
        return max(8, _round_up(n, 8))
    return 1024


def _make_kernel(num_hidden_layers, half_pad):
    L = num_hidden_layers

    def kernel(x_ref, delta_ref, w0_ref, b0_ref, wh_ref, bh_ref,
               w_head_ref, b_head_ref, out_ref):
        # x_ref:      (TB, d_in)   f32  -- narrow input, no feature padding
        # delta_ref:  (TB, 1)      f32
        # w0_ref:     (d_in, d_pad) f32 -- fused (cns|evn) layer-0 weight
        # b0_ref:     (1, d_pad)   f32
        # wh_ref:     (Lh, d_pad, d_pad) bf16 -- fused hidden layers 1..L-1
        # bh_ref:     (Lh, 1, d_pad)     f32
        # w_head_ref: (d_pad, 2*half_pad) bf16 -- [cns head | evn head]
        # b_head_ref: (1, 2*half_pad)     f32
        # out_ref:    (TB, half_pad) f32 lane-dense [joint_mean|joint_logvar]
        #
        # Layer 0 in f32: K = d_in is tiny, keeps the input quantization
        # error out (per review); activations go bf16 afterwards.
        h = jnp.tanh(
            jnp.dot(x_ref[...], w0_ref[...], preferred_element_type=jnp.float32)
            + b0_ref[...]
        ).astype(jnp.bfloat16)
        for l in range(L - 1):  # static unroll over remaining hidden layers
            acc = jnp.dot(h, wh_ref[l],
                          preferred_element_type=jnp.float32) + bh_ref[l]
            h = jnp.tanh(acc).astype(jnp.bfloat16)
        head = jnp.dot(h, w_head_ref[...],
                       preferred_element_type=jnp.float32) + b_head_ref[...]
        # Fused delta select.  Lanes [0, half_pad) hold the cns branch's
        # [mean|log_var], lanes [half_pad, 2*half_pad) the evn branch's.
        # Both slices sit on 128-lane (vreg) boundaries -> plain VPU select.
        is_evn = delta_ref[...] > 0.5
        out_ref[...] = jnp.where(is_evn,
                                 head[:, half_pad:2 * half_pad],
                                 head[:, 0:half_pad])

    return kernel


def init_params(key, layer_sizes, latent_dim):
    """PyTorch nn.Linear-style params, stored transposed as (in, out).
    Biases stored as (1, out).  Order per branch: hidden layers, mean head,
    log_var head; branch 0 = cns, branch 1 = evn."""

    def linear(k, d_in, d_out):
        kw, kb = jax.random.split(k)
        bound = 1.0 / jnp.sqrt(d_in)
        w = jax.random.uniform(kw, (d_in, d_out), jnp.float32, -bound, bound)
        b = jax.random.uniform(kb, (1, d_out), jnp.float32, -bound, bound)
        return w, b

    params = []
    for _branch in range(2):
        for din, dout in zip(layer_sizes[:-1], layer_sizes[1:]):
            key, sub = jax.random.split(key)
            params.extend(linear(sub, din, dout))
        key, sub = jax.random.split(key)
        params.extend(linear(sub, layer_sizes[-1], latent_dim))   # mean head
        key, sub = jax.random.split(key)
        params.extend(linear(sub, layer_sizes[-1], latent_dim))   # log_var head
    return params


def pack_params(params, layer_sizes, latent_dim):
    """Fuse the two branches into padded, lane-dense weight blocks (call ONCE,
    outside the forward).  Hidden-state layout after each fused layer:
    cols [0:H) = cns branch, cols [H:2H) = evn branch, rest zero-padded."""
    layer_sizes = tuple(layer_sizes)
    L = len(layer_sizes) - 1
    ppb = 2 * L + 4                       # params per branch
    d_in = layer_sizes[0]
    hidden = layer_sizes[1:]
    d_pad = _round_up(2 * max(hidden), 128)
    half_pad = _round_up(2 * latent_dim, 128)
    head_pad = 2 * half_pad
    h_last = layer_sizes[-1]
    ld = latent_dim

    # --- layer 0 (stays f32; consumes the narrow input directly) ---
    h1 = layer_sizes[1]
    w0 = jnp.zeros((d_in, d_pad), jnp.float32)
    b0 = jnp.zeros((1, d_pad), jnp.float32)
    w0 = w0.at[:, :h1].set(params[0])
    w0 = w0.at[:, h1:2 * h1].set(params[ppb + 0])
    b0 = b0.at[0, :h1].set(params[1].reshape(-1))
    b0 = b0.at[0, h1:2 * h1].set(params[ppb + 1].reshape(-1))

    # --- hidden layers 1..L-1, stacked block-diagonal, bf16 ---
    Lh = max(L - 1, 1)
    wh = jnp.zeros((Lh, d_pad, d_pad), jnp.float32)
    bh = jnp.zeros((Lh, 1, d_pad), jnp.float32)
    for l in range(1, L):
        h_in = layer_sizes[l]
        h_out = layer_sizes[l + 1]
        w_c = params[2 * l]
        b_c = params[2 * l + 1].reshape(-1)
        w_e = params[ppb + 2 * l]
        b_e = params[ppb + 2 * l + 1].reshape(-1)
        wh = wh.at[l - 1, :h_in, :h_out].set(w_c)
        wh = wh.at[l - 1, h_in:2 * h_in, h_out:2 * h_out].set(w_e)
        bh = bh.at[l - 1, 0, :h_out].set(b_c)
        bh = bh.at[l - 1, 0, h_out:2 * h_out].set(b_e)

    # --- fused head: lanes [0, half_pad) = cns [mean|logvar],
    #                 lanes [half_pad, 2*half_pad) = evn [mean|logvar] ---
    w_m_c, b_m_c = params[2 * L], params[2 * L + 1].reshape(-1)
    w_v_c, b_v_c = params[2 * L + 2], params[2 * L + 3].reshape(-1)
    w_m_e, b_m_e = params[ppb + 2 * L], params[ppb + 2 * L + 1].reshape(-1)
    w_v_e, b_v_e = params[ppb + 2 * L + 2], params[ppb + 2 * L + 3].reshape(-1)

    w_head = jnp.zeros((d_pad, head_pad), jnp.float32)
    b_head = jnp.zeros((1, head_pad), jnp.float32)
    w_head = w_head.at[:h_last, 0:ld].set(w_m_c)
    w_head = w_head.at[:h_last, ld:2 * ld].set(w_v_c)
    w_head = w_head.at[h_last:2 * h_last, half_pad:half_pad + ld].set(w_m_e)
    w_head = w_head.at[h_last:2 * h_last,
                       half_pad + ld:half_pad + 2 * ld].set(w_v_e)
    b_head = b_head.at[0, 0:ld].set(b_m_c)
    b_head = b_head.at[0, ld:2 * ld].set(b_v_c)
    b_head = b_head.at[0, half_pad:half_pad + ld].set(b_m_e)
    b_head = b_head.at[0, half_pad + ld:half_pad + 2 * ld].set(b_v_e)

    return {
        "w0": w0, "b0": b0,
        "wh": wh.astype(jnp.bfloat16), "bh": bh,
        "w_head": w_head.astype(jnp.bfloat16), "b_head": b_head,
    }


@partial(jax.jit, static_argnames=("layer_sizes", "latent_dim", "tile_rows"))
def delta_encoder_forward(x, y, delta, packed, layer_sizes, latent_dim,
                          tile_rows=None):
    """Pallas-backed forward: returns (joint_mean, joint_log_var).
    `packed` must come from pack_params() (call once, reuse per forward)."""
    layer_sizes = tuple(layer_sizes)
    if y.ndim == 1:
        y = y[:, None]
    if delta.ndim == 1:
        delta = delta[:, None]

    xcat = jnp.concatenate([x, y], axis=-1).astype(jnp.float32)   # (N, d_in)
    N, d_in = xcat.shape
    assert d_in == layer_sizes[0]
    L = len(layer_sizes) - 1
    ld = latent_dim
    half_pad = _round_up(2 * ld, 128)
    head_pad = 2 * half_pad
    d_pad = packed["w0"].shape[1]
    Lh = packed["wh"].shape[0]

    if tile_rows is None:
        tile_rows = _auto_tile_rows(N)
    tile_rows = max(8, _round_up(tile_rows, 8))
    n_pad = _round_up(N, tile_rows)

    delta_f = delta.astype(jnp.float32)
    if n_pad != N:
        # Only the row count is padded; padded rows get delta=0 (valid, and
        # they are sliced away below).  No feature-dim padding in HBM.
        xcat = jnp.pad(xcat, ((0, n_pad - N), (0, 0)))
        delta_f = jnp.pad(delta_f, ((0, n_pad - N), (0, 0)))

    grid = (n_pad // tile_rows,)
    kernel = _make_kernel(L, half_pad)

    out = pl.pallas_call(
        kernel,
        out_shape=jax.ShapeDtypeStruct((n_pad, half_pad), jnp.float32),
        grid_spec=pltpu.PrefetchScalarGridSpec(
            num_scalar_prefetch=0,
            grid=grid,
            in_specs=[
                pl.BlockSpec((tile_rows, d_in), lambda i: (i, 0)),
                pl.BlockSpec((tile_rows, 1), lambda i: (i, 0)),
                pl.BlockSpec((d_in, d_pad), lambda i: (0, 0)),
                pl.BlockSpec((1, d_pad), lambda i: (0, 0)),
                pl.BlockSpec((Lh, d_pad, d_pad), lambda i: (0, 0, 0)),
                pl.BlockSpec((Lh, 1, d_pad), lambda i: (0, 0, 0)),
                pl.BlockSpec((d_pad, head_pad), lambda i: (0, 0)),
                pl.BlockSpec((1, head_pad), lambda i: (0, 0)),
            ],
            out_specs=pl.BlockSpec((tile_rows, half_pad), lambda i: (i, 0)),
        ),
        compiler_params=pltpu.CompilerParams(
            dimension_semantics=("parallel",),
            # Explicit limit so the same tiling is portable to v7x's smaller
            # scoped/physical VMEM; per-step usage here is ~1.5 MiB.
            vmem_limit_bytes=32 * 1024 * 1024,
        ),
    )(xcat, delta_f, packed["w0"], packed["b0"], packed["wh"], packed["bh"],
      packed["w_head"], packed["b_head"])

    joint_mean = out[:N, 0:ld]
    joint_log_var = out[:N, ld:2 * ld]
    return joint_mean, joint_log_var


def delta_encoder_reference(x, y, delta, params, layer_sizes, latent_dim):
    """Pure-JAX f32 reference with the same both-branches-then-select
    semantics as the PyTorch gather/scatter forward."""
    if y.ndim == 1:
        y = y[:, None]
    if delta.ndim == 1:
        delta = delta[:, None]
    xcat = jnp.concatenate([x, y], axis=-1).astype(jnp.float32)
    L = len(layer_sizes) - 1
    ppb = 2 * L + 4

    def branch(p0):
        h = xcat
        idx = p0
        for _ in range(L):
            h = jnp.tanh(h @ params[idx] + params[idx + 1])
            idx += 2
        mean = h @ params[idx] + params[idx + 1]
        log_var = h @ params[idx + 2] + params[idx + 3]
        return mean, log_var

    m_cns, l_cns = branch(0)
    m_evn, l_evn = branch(ppb)
    is_evn = delta.astype(jnp.float32) > 0.5
    return jnp.where(is_evn, m_evn, m_cns), jnp.where(is_evn, l_evn, l_cns)


if __name__ == "__main__":
    # Small shapes consistent with the module: x:[N, F], y:[N], delta:[N]
    F = 8
    layer_sizes = (F + 1, 32, 32)   # layer_sizes[0] == F + 1 (x concat y)
    latent_dim = 16

    key = jax.random.PRNGKey(0)
    kp, kdata = jax.random.split(key)
    params = init_params(kp, layer_sizes, latent_dim)
    packed = pack_params(params, layer_sizes, latent_dim)   # hoisted: pack once

    ok = True
    for N in (16, 300):   # 300 exercises row padding / non-multiple-of-8 path
        kdata, kx, ky, kd = jax.random.split(kdata, 4)
        x = jax.random.normal(kx, (N, F), jnp.float32)
        y = jax.random.normal(ky, (N,), jnp.float32)
        delta = (jax.random.uniform(kd, (N,)) > 0.5).astype(jnp.float32)

        joint_mean, joint_log_var = delta_encoder_forward(
            x, y, delta, packed, layer_sizes=layer_sizes, latent_dim=latent_dim)
        jax.block_until_ready((joint_mean, joint_log_var))

        ref_mean, ref_log_var = delta_encoder_reference(
            x, y, delta, params, layer_sizes, latent_dim)

        assert joint_mean.shape == (N, latent_dim)
        assert joint_log_var.shape == (N, latent_dim)
        # Hidden/head matmuls use bf16 operands (f32 accumulation); layer 0
        # stays f32 -> loose-ish tolerance vs. the pure-f32 reference.
        ok &= bool(jnp.allclose(joint_mean, ref_mean, atol=3e-2, rtol=3e-2))
        ok &= bool(jnp.allclose(joint_log_var, ref_log_var, atol=3e-2, rtol=3e-2))

    assert ok
    print("KERNEL_OK")
</pallas_src>

<mosaic_0001>
module attributes {stable_mosaic.version = 11 : i64} {
  func.func @kernel(%arg0: i32, %arg1: memref<16x9xf32, #tpu.memory_space<vmem>>, %arg2: memref<16x1xf32, #tpu.memory_space<vmem>>, %arg3: memref<9x128xf32, #tpu.memory_space<vmem>>, %arg4: memref<1x128xf32, #tpu.memory_space<vmem>>, %arg5: memref<1x128x128xbf16, #tpu.memory_space<vmem>>, %arg6: memref<1x1x128xf32, #tpu.memory_space<vmem>>, %arg7: memref<128x256xbf16, #tpu.memory_space<vmem>>, %arg8: memref<1x256xf32, #tpu.memory_space<vmem>>, %arg9: memref<16x128xf32, #tpu.memory_space<vmem>>) attributes {dimension_semantics = [#tpu.dimension_semantics<parallel>], iteration_bounds = array<i64: 1>, scalar_prefetch = 0 : i64, scratch_operands = 0 : i64, tpu.core_type = #tpu.core_type<tc>, window_params = [{transform_indices = @transform_0, window_bounds = array<i64: 16, 9>}, {transform_indices = @transform_1, window_bounds = array<i64: 16, 1>}, {pipeline_mode = #tpu.pipeline_mode<synchronous>, transform_indices = @transform_2, window_bounds = array<i64: 9, 128>}, {pipeline_mode = #tpu.pipeline_mode<synchronous>, transform_indices = @transform_3, window_bounds = array<i64: 1, 128>}, {pipeline_mode = #tpu.pipeline_mode<synchronous>, transform_indices = @transform_4, window_bounds = array<i64: 1, 128, 128>}, {pipeline_mode = #tpu.pipeline_mode<synchronous>, transform_indices = @transform_5, window_bounds = array<i64: 1, 1, 128>}, {pipeline_mode = #tpu.pipeline_mode<synchronous>, transform_indices = @transform_6, window_bounds = array<i64: 128, 256>}, {pipeline_mode = #tpu.pipeline_mode<synchronous>, transform_indices = @transform_7, window_bounds = array<i64: 1, 256>}, {transform_indices = @transform_8, window_bounds = array<i64: 16, 128>}]} {
    %c0 = arith.constant 0 : index
    %c0_0 = arith.constant 0 : index
    %0 = vector.load %arg1[%c0, %c0_0] : memref<16x9xf32, #tpu.memory_space<vmem>>, vector<16x9xf32>
    %c0_1 = arith.constant 0 : index
    %c0_2 = arith.constant 0 : index
    %1 = vector.load %arg3[%c0_1, %c0_2] : memref<9x128xf32, #tpu.memory_space<vmem>>, vector<9x128xf32>
    %cst = arith.constant dense<0.000000e+00> : vector<16x128xf32>
    %2 = tpu.matmul %0, %1, %cst {dimension_numbers = #tpu.dot_dimension_numbers<[1], [0], [0], [1], [0, 0, 1, 1], [], []>} : vector<16x9xf32>, vector<9x128xf32>, vector<16x128xf32> -> vector<16x128xf32>
    %c0_3 = arith.constant 0 : index
    %c0_4 = arith.constant 0 : index
    %3 = vector.load %arg4[%c0_3, %c0_4] : memref<1x128xf32, #tpu.memory_space<vmem>>, vector<1x128xf32>
    %4 = vector.broadcast %3 : vector<1x128xf32> to vector<16x128xf32>
    %5 = arith.addf %2, %4 : vector<16x128xf32>
    %6 = math.tanh %5 : vector<16x128xf32>
    %7 = arith.truncf %6 : vector<16x128xf32> to vector<16x128xbf16>
    %c0_5 = arith.constant 0 : index
    %c0_6 = arith.constant 0 : index
    %c0_7 = arith.constant 0 : index
    %8 = vector.load %arg5[%c0_5, %c0_6, %c0_7] : memref<1x128x128xbf16, #tpu.memory_space<vmem>>, vector<1x128x128xbf16>
    %9 = vector.shape_cast %8 : vector<1x128x128xbf16> to vector<128x128xbf16>
    %cst_8 = arith.constant dense<0.000000e+00> : vector<16x128xf32>
    %10 = tpu.matmul %7, %9, %cst_8 {dimension_numbers = #tpu.dot_dimension_numbers<[1], [0], [0], [1], [0, 0, 1, 1], [], []>} : vector<16x128xbf16>, vector<128x128xbf16>, vector<16x128xf32> -> vector<16x128xf32>
    %c0_9 = arith.constant 0 : index
    %c0_10 = arith.constant 0 : index
    %c0_11 = arith.constant 0 : index
    %11 = vector.load %arg6[%c0_9, %c0_10, %c0_11] : memref<1x1x128xf32, #tpu.memory_space<vmem>>, vector<1x1x128xf32>
    %12 = vector.shape_cast %11 : vector<1x1x128xf32> to vector<1x128xf32>
    %13 = vector.broadcast %12 : vector<1x128xf32> to vector<16x128xf32>
    %14 = arith.addf %10, %13 : vector<16x128xf32>
    %15 = math.tanh %14 : vector<16x128xf32>
    %16 = arith.truncf %15 : vector<16x128xf32> to vector<16x128xbf16>
    %c0_12 = arith.constant 0 : index
    %c0_13 = arith.constant 0 : index
    %17 = vector.load %arg7[%c0_12, %c0_13] : memref<128x256xbf16, #tpu.memory_space<vmem>>, vector<128x256xbf16>
    %cst_14 = arith.constant dense<0.000000e+00> : vector<16x256xf32>
    %18 = tpu.matmul %16, %17, %cst_14 {dimension_numbers = #tpu.dot_dimension_numbers<[1], [0], [0], [1], [0, 0, 1, 1], [], []>} : vector<16x128xbf16>, vector<128x256xbf16>, vector<16x256xf32> -> vector<16x256xf32>
    %c0_15 = arith.constant 0 : index
    %c0_16 = arith.constant 0 : index
    %19 = vector.load %arg8[%c0_15, %c0_16] : memref<1x256xf32, #tpu.memory_space<vmem>>, vector<1x256xf32>
    %20 = vector.broadcast %19 : vector<1x256xf32> to vector<16x256xf32>
    %21 = arith.addf %18, %20 : vector<16x256xf32>
    %c0_17 = arith.constant 0 : index
    %c0_18 = arith.constant 0 : index
    %22 = vector.load %arg2[%c0_17, %c0_18] : memref<16x1xf32, #tpu.memory_space<vmem>>, vector<16x1xf32>
    %cst_19 = arith.constant 5.000000e-01 : f32
    %23 = vector.broadcast %cst_19 : f32 to vector<16x1xf32>
    %24 = arith.cmpf ogt, %22, %23 : vector<16x1xf32>
    %25 = vector.extract_strided_slice %21 {offsets = [0, 128], sizes = [16, 128], strides = [1, 1]} : vector<16x256xf32> to vector<16x128xf32>
    %26 = vector.extract_strided_slice %21 {offsets = [0, 0], sizes = [16, 128], strides = [1, 1]} : vector<16x256xf32> to vector<16x128xf32>
    %27 = vector.shape_cast %24 : vector<16x1xi1> to vector<16x1xi1>
    %28 = vector.broadcast %27 : vector<16x1xi1> to vector<16x128xi1>
    %29 = arith.select %28, %25, %26 : vector<16x128xi1>, vector<16x128xf32>
    %c0_20 = arith.constant 0 : index
    %c0_21 = arith.constant 0 : index
    %30 = vector.load %arg9[%c0_20, %c0_21] : memref<16x128xf32, #tpu.memory_space<vmem>>, vector<16x128xf32>
    tpu.vector_store %arg9[%c0_20, %c0_21], %29 {strides = array<i32>} : memref<16x128xf32, #tpu.memory_space<vmem>>, vector<16x128xf32>,
    return
  }
  func.func @transform_0(%arg0: i32) -> (i32, i32) {
    %c0_i32 = arith.constant 0 : i32
    %c0_i32_0 = arith.constant 0 : i32
    return %arg0, %c0_i32 : i32, i32
  }
  func.func @transform_1(%arg0: i32) -> (i32, i32) {
    %c0_i32 = arith.constant 0 : i32
    %c0_i32_0 = arith.constant 0 : i32
    return %arg0, %c0_i32 : i32, i32
  }
  func.func @transform_2(%arg0: i32) -> (i32, i32) {
    %c0_i32 = arith.constant 0 : i32
    %c0_i32_0 = arith.constant 0 : i32
    %c0_i32_1 = arith.constant 0 : i32
    return %c0_i32, %c0_i32_0 : i32, i32
  }
  func.func @transform_3(%arg0: i32) -> (i32, i32) {
    %c0_i32 = arith.constant 0 : i32
    %c0_i32_0 = arith.constant 0 : i32
    %c0_i32_1 = arith.constant 0 : i32
    return %c0_i32, %c0_i32_0 : i32, i32
  }
  func.func @transform_4(%arg0: i32) -> (i32, i32, i32) {
    %c0_i32 = arith.constant 0 : i32
    %c0_i32_0 = arith.constant 0 : i32
    %c0_i32_1 = arith.constant 0 : i32
    %c0_i32_2 = arith.constant 0 : i32
    return %c0_i32, %c0_i32_0, %c0_i32_1 : i32, i32, i32
  }
  func.func @transform_5(%arg0: i32) -> (i32, i32, i32) {
    %c0_i32 = arith.constant 0 : i32
    %c0_i32_0 = arith.constant 0 : i32
    %c0_i32_1 = arith.constant 0 : i32
    %c0_i32_2 = arith.constant 0 : i32
    return %c0_i32, %c0_i32_0, %c0_i32_1 : i32, i32, i32
  }
  func.func @transform_6(%arg0: i32) -> (i32, i32) {
    %c0_i32 = arith.constant 0 : i32
    %c0_i32_0 = arith.constant 0 : i32
    %c0_i32_1 = arith.constant 0 : i32
    return %c0_i32, %c0_i32_0 : i32, i32
  }
  func.func @transform_7(%arg0: i32) -> (i32, i32) {
    %c0_i32 = arith.constant 0 : i32
    %c0_i32_0 = arith.constant 0 : i32
    %c0_i32_1 = arith.constant 0 : i32
    return %c0_i32, %c0_i32_0 : i32, i32
  }
  func.func @transform_8(%arg0: i32) -> (i32, i32) {
    %c0_i32 = arith.constant 0 : i32
    %c0_i32_0 = arith.constant 0 : i32
    return %arg0, %c0_i32 : i32, i32
  }
}

</mosaic_0001>

<llo_original>
// kernel: delta_encoder_forward.1
$region0: #{delta_encoder_forward.1}
  #allocation0 [shape = 'u32[]', space=smem, size = 0x4, offset = 0x4, fixed_abs, tag = 'smem constant byte address 0x4 - core index']
  #allocation1 [shape = 'u32[144,128]{1,0:T(1,128)}', space=vmem, size = 0x12000, scoped, tag = 'internal scratch']
  %s0 = inlined_call_operand.vmem [shape: f32[16,9], index: 0, kind: input, shape index: {}]
  %s1 = inlined_call_operand.vmem [shape: f32[16,1], index: 1, kind: input, shape index: {}]
  %s2 = inlined_call_operand.hbm [shape: f32[9,128], index: 2, kind: input, shape index: {}]
  %s3 = inlined_call_operand.vmem [shape: f32[1,128], index: 3, kind: input, shape index: {}]
  %s4 = inlined_call_operand.hbm [shape: bf16[1,128,128], index: 4, kind: input, shape index: {}]
  %s5 = inlined_call_operand.vmem [shape: f32[1,1,128], index: 5, kind: input, shape index: {}]
  %s6 = inlined_call_operand.vmem [shape: bf16[128,256], index: 6, kind: input, shape index: {}]
  %s7 = inlined_call_operand.vmem [shape: f32[1,256], index: 7, kind: input, shape index: {}]
  %s8 = inlined_call_operand.vmem [shape: f32[16,128], index: 8, kind: output, shape index: {}]
  %s9 = sld [smem:[#allocation0]]
  $region50: #{delta_encoder_forward.1} parent=0
    _
  %s11 = ssub.s32 1, %s9
  %s12 = scalar_select 0, %s11, %s9
  $region1: #{delta_encoder_forward.1} parent=0
    #allocation2 [shape = 'u8[8192]{0}', space=vmem, size = 0x2000, scoped, tag = 'input window, operand 2, single buffered']
    #allocation3 [shape = 's32[1]{0}', space=sflag, size = 0x4, scoped, tag = 'scoped memory for delta_encoder_forward.1']
    #allocation4 [shape = 'u8[32768]{0}', space=vmem, size = 0x8000, scoped, tag = 'input window, operand 4, single buffered']
    #allocation5 [shape = 's32[1]{0}', space=sflag, size = 0x4, scoped, tag = 'scoped memory for delta_encoder_forward.1']
    %13 = vsyncpa [#allocation3], 0
    %14 = vsyncpa [#allocation5], 0
    // Predicated region
    $region2: #{delta_encoder_forward.1} parent=1 // pred_check
      _
    $region3: #{delta_encoder_forward.1} parent=1 // pred_check_branch
      %16 = sbr.rel (0) target = $region5
    $region4: #{delta_encoder_forward.1} parent=1 // pred_region
      _
    $region5: #{delta_encoder_forward.1} parent=1 // pred_fallthru
      _
    // Predicated region
    $region6: #{delta_encoder_forward.1} parent=1 // pred_check
      _
    $region7: #{delta_encoder_forward.1} parent=1 // pred_check_branch
      %18 = sbr.rel (0) target = $region9
    $region8: #{delta_encoder_forward.1} parent=1 // pred_region
      _
    $region9: #{delta_encoder_forward.1} parent=1 // pred_fallthru
      _
    // Predicated region
    $region10: #{delta_encoder_forward.1} parent=1 // pred_check
      _
    $region11: #{delta_encoder_forward.1} parent=1 // pred_check_branch
      %20 = sbr.rel (0) target = $region13
    $region12: #{delta_encoder_forward.1} parent=1 // pred_region
      %s22 = ssub.s32 256, 256
      %23 = vsyncadd [#allocation3], %s22
      %s24 = sshll.u32 [#allocation2], 4
      %s25 = int_to_ptr.vmem [resolvable:$true] %s24
      %30 = dma.hbm_to_vmem [thread:$0]  %s2, 256, %s25, [#allocation3], 128, 128, 8
    $region13: #{delta_encoder_forward.1} parent=1 // pred_fallthru
      _
    // Predicated region
    $region14: #{delta_encoder_forward.1} parent=1 // pred_check
      _
    $region15: #{delta_encoder_forward.1} parent=1 // pred_check_branch
      %32 = sbr.rel (0) target = $region17
    $region16: #{delta_encoder_forward.1} parent=1 // pred_region
      _
    $region17: #{delta_encoder_forward.1} parent=1 // pred_fallthru
      _
    // Predicated region
    $region18: #{delta_encoder_forward.1} parent=1 // pred_check
      _
    $region19: #{delta_encoder_forward.1} parent=1 // pred_check_branch
      %34 = sbr.rel (0) target = $region21
    $region20: #{delta_encoder_forward.1} parent=1 // pred_region
      %s36 = ssub.s32 1024, 1024
      %37 = vsyncadd [#allocation5], %s36
      %s38 = sshll.u32 [#allocation4], 4
      %s39 = int_to_ptr.vmem [resolvable:$true] %s38
      %44 = dma.hbm_to_vmem [thread:$0]  %s4, 1024, %s39, [#allocation5], 64, 64, 4
    $region21: #{delta_encoder_forward.1} parent=1 // pred_fallthru
      _
    // Predicated region
    $region22: #{delta_encoder_forward.1} parent=1 // pred_check
      _
    $region23: #{delta_encoder_forward.1} parent=1 // pred_check_branch
      %46 = sbr.rel (0) target = $region25
    $region24: #{delta_encoder_forward.1} parent=1 // pred_region
      _
    $region25: #{delta_encoder_forward.1} parent=1 // pred_fallthru
      _
    // Predicated region
    $region26: #{delta_encoder_forward.1} parent=1 // pred_check
      _
    $region27: #{delta_encoder_forward.1} parent=1 // pred_check_branch
      %48 = sbr.rel (0) target = $region29
    $region28: #{delta_encoder_forward.1} parent=1 // pred_region
      _
    $region29: #{delta_encoder_forward.1} parent=1 // pred_fallthru
      _
    // Predicated region
    $region30: #{delta_encoder_forward.1} parent=1 // pred_check
      _
    $region31: #{delta_encoder_forward.1} parent=1 // pred_check_branch
      %50 = sbr.rel (0) target = $region33
    $region32: #{delta_encoder_forward.1} parent=1 // pred_region
      _
    $region33: #{delta_encoder_forward.1} parent=1 // pred_fallthru
      _
    // Predicated region
    $region34: #{delta_encoder_forward.1} parent=1 // pred_check
      _
    $region35: #{delta_encoder_forward.1} parent=1 // pred_check_branch
      %52 = sbr.rel (0) target = $region37
    $region36: #{delta_encoder_forward.1} parent=1 // pred_region
      %53 = dma.done [#allocation3], 256
    $region37: #{delta_encoder_forward.1} parent=1 // pred_fallthru
      _
    // Predicated region
    $region38: #{delta_encoder_forward.1} parent=1 // pred_check
      _
    $region39: #{delta_encoder_forward.1} parent=1 // pred_check_branch
      %55 = sbr.rel (0) target = $region41
    $region40: #{delta_encoder_forward.1} parent=1 // pred_region
      %56 = dma.done [#allocation5], 1024
    $region41: #{delta_encoder_forward.1} parent=1 // pred_fallthru
      _
    %v58 = vld [vmem:[%s0] sm:$0xff]
    %v59 = vld [vmem:[%s0 + $0x8] sm:$0xff]
    %v60 = vld [vmem:[#allocation2] sm:$0xff]
    %v61 = vld [vmem:[#allocation2 + $0x8] sm:$0x1]
    %v62 = vld [vmem:[%s3] sm:$0x1]
    %v64 = vlaneseq
    %v65 = vshrl.u32 %v64, 7
    %v66 = vsub.s32 0, %v65
    %v67 = vrot.slane %v62, %v66
    %vm69 = vcmask 72704
    %v71 = vsel %vm69, %v58, 0
    %v74 = vsel %vm69, %v59, 0
    %vm76 = vcmask 1040384
    %v78 = vsel %vm76, %v61, 0
    %80 = vmatprep.subr.mxu0 0.0
    %81 = vmatpush1.msra.mxu0 %v60
    %82 = vmatprep.subr.mxu0 0.0
    %83 = vmatpush1.msra.mxu0 %v78
    %84 = vmatprep.subr.mxu0 0.0
    %85 = vmatpush1.msra.mxu0 0.0
    %86 = vmatprep.subr.mxu0 0.0
    %87 = vmatpush1.msra.mxu0 0.0
    %88 = vmatprep.subr.mxu0 0.0
    %89 = vmatpush1.msra.mxu0 0.0
    %90 = vmatprep.subr.mxu0 0.0
    %91 = vmatpush1.msra.mxu0 0.0
    %92 = vmatprep.subr.mxu0 0.0
    %93 = vmatpush1.msra.mxu0 0.0
    %94 = vmatprep.subr.mxu0 0.0
    %95 = vmatpush1.msra.mxu0 0.0
    %96 = vmatprep.subr.mxu0 0.0
    %97 = vmatpush1.msra.mxu0 0.0
    %98 = vmatprep.subr.mxu0 0.0
    %99 = vmatpush1.msra.mxu0 0.0
    %100 = vmatprep.subr.mxu0 0.0
    %101 = vmatpush1.msra.mxu0 0.0
    %102 = vmatprep.subr.mxu0 0.0
    %103 = vmatpush1.msra.mxu0 0.0
    %104 = vmatprep.subr.mxu0 0.0
    %105 = vmatpush1.msra.mxu0 0.0
    %106 = vmatprep.subr.mxu0 0.0
    %107 = vmatpush1.msra.mxu0 0.0
    %108 = vmatprep.subr.mxu0 0.0
    %109 = vmatpush1.msra.mxu0 0.0
    %110 = vmatprep.subr.mxu0 0.0
    %111 = vmatpush1.msra.mxu0 0.0
    %112 = vmatprep.subr.mxu0 0.0
    %113 = vmatpush1.msra.mxu0 0.0
    %114 = vmatprep.subr.mxu0 0.0
    %115 = vmatpush1.msra.mxu0 0.0
    %116 = vmatprep.subr.mxu0 0.0
    %117 = vmatpush1.msra.mxu0 0.0
    %118 = vmatprep.subr.mxu0 0.0
    %119 = vmatpush1.msra.mxu0 0.0
    %120 = vmatprep.subr.mxu0 0.0
    %121 = vmatpush1.msra.mxu0 0.0
    %122 = vmatprep.subr.mxu0 0.0
    %123 = vmatpush1.msra.mxu0 0.0
    %124 = vmatprep.subr.mxu0 0.0
    %125 = vmatpush1.msra.mxu0 0.0
    %126 = vmatprep.subr.mxu0 0.0
    %127 = vmatpush1.msra.mxu0 0.0
    %128 = vmatprep.subr.mxu0 0.0
    %129 = vmatpush1.msra.mxu0 0.0
    %130 = vmatprep.subr.mxu0 0.0
    %131 = vmatpush1.msra.mxu0 0.0
    %132 = vmatprep.subr.mxu0 0.0
    %133 = vmatpush1.msra.mxu0 0.0
    %134 = vmatprep.subr.mxu0 0.0
    %135 = vmatpush1.msra.mxu0 0.0
    %136 = vmatprep.subr.mxu0 0.0
    %137 = vmatpush1.msra.mxu0 0.0
    %138 = vmatprep.subr.mxu0 0.0
    %139 = vmatpush1.msra.mxu0 0.0
    %140 = vmatprep.subr.mxu0 0.0
    %141 = vmatpush1.msra.mxu0 0.0
    %142 = vmatprep.subr.mxu0 0.0
    %143 = vmatpush1.msra.mxu0 0.0
    %144 = vmatprep.mubr.f32.mxu0 0.0
    %145 = vmatmul.mubr.f32.gmra.mrb[0].mxu0 %v71
    %v146 = vpop.f32.mrb[0].mxu0
    %v147 = vadd.f32 %v67, %v146
    %v148 = vpop.f32.mrb[0].mxu0
    %149 = vmatprep.mubr.f32.mxu0 0.0
    %150 = vmatmul.mubr.f32.gmra.mrb[0].mxu0 %v74
    %v151 = vpop.f32.mrb[0].mxu0
    %v152 = vadd.f32 %v67, %v151
    %v153 = vpop.f32.mrb[0].mxu0
    %154 = vdwg.mxu0
    %v155 = vtanh.pop %v147
    %v156 = vtanh.pop %v152
    %v157 = vpack.c.bf16 %v156, %v155
    %v158 = vld [vmem:[#allocation4] sm:$0xf]
    %v159 = vld [vmem:[#allocation4 + $0x4] sm:$0xf]
    %v160 = vld [vmem:[#allocation4 + $0x8] sm:$0xf]
    %v161 = vld [vmem:[#allocation4 + $0xc] sm:$0xf]
    %v162 = vld [vmem:[#allocation4 + $0x10] sm:$0xf]
    %v163 = vld [vmem:[#allocation4 + $0x14] sm:$0xf]
    %v164 = vld [vmem:[#allocation4 + $0x18] sm:$0xf]
    %v165 = vld [vmem:[#allocation4 + $0x1c] sm:$0xf]
    %v166 = vld [vmem:[#allocation4 + $0x20] sm:$0xf]
    %v167 = vld [vmem:[#allocation4 + $0x24] sm:$0xf]
    %v168 = vld [vmem:[#allocation4 + $0x28] sm:$0xf]
    %v169 = vld [vmem:[#allocation4 + $0x2c] sm:$0xf]
    %v170 = vld [vmem:[#allocation4 + $0x30] sm:$0xf]
    %v171 = vld [vmem:[#allocation4 + $0x34] sm:$0xf]
    %v172 = vld [vmem:[#allocation4 + $0x38] sm:$0xf]
    %v173 = vld [vmem:[#allocation4 + $0x3c] sm:$0xf]
    %v174 = vld [vmem:[%s5] sm:$0x1]
    %v176 = vlaneseq
    %v177 = vshrl.u32 %v176, 7
    %v178 = vsub.s32 0, %v177
    %v179 = vrot.slane %v174, %v178
    %v197 = vunpack.c.l.b16 %v158
    %v198 = vunpack.c.l.b16 %v159
    %v199 = vunpack.c.l.b16 %v160
    %v200 = vunpack.c.l.b16 %v161
    %v201 = vunpack.c.l.b16 %v162
    %v202 = vunpack.c.l.b16 %v163
    %v203 = vunpack.c.l.b16 %v164
    %v204 = vunpack.c.l.b16 %v165
    %v205 = vunpack.c.l.b16 %v166
    %v206 = vunpack.c.l.b16 %v167
    %v207 = vunpack.c.l.b16 %v168
    %v208 = vunpack.c.l.b16 %v169
    %v209 = vunpack.c.l.b16 %v170
    %v210 = vunpack.c.l.b16 %v171
    %v211 = vunpack.c.l.b16 %v172
    %v212 = vunpack.c.l.b16 %v173
    %v213 = vpack.c.b16 %v198, %v197
    %v214 = vpack.c.b16 %v200, %v199
    %v215 = vpack.c.b16 %v202, %v201
    %v216 = vpack.c.b16 %v204, %v203
    %v217 = vpack.c.b16 %v206, %v205
    %v218 = vpack.c.b16 %v208, %v207
    %v219 = vpack.c.b16 %v210, %v209
    %v220 = vpack.c.b16 %v212, %v211
    %229 = vmatprep.subr.bf16.mxu0 0
    %230 = vmatpush1.bf16.msra.mxu0 %v213
    %231 = vmatprep.subr.bf16.mxu0 0
    %232 = vmatpush1.bf16.msra.mxu0 %v214
    %233 = vmatprep.subr.bf16.mxu0 0
    %234 = vmatpush1.bf16.msra.mxu0 %v215
    %235 = vmatprep.subr.bf16.mxu0 0
    %236 = vmatpush1.bf16.msra.mxu0 %v216
    %237 = vmatprep.subr.bf16.mxu0 0
    %238 = vmatpush1.bf16.msra.mxu0 %v217
    %239 = vmatprep.subr.bf16.mxu0 0
    %240 = vmatpush1.bf16.msra.mxu0 %v218
    %241 = vmatprep.subr.bf16.mxu0 0
    %242 = vmatpush1.bf16.msra.mxu0 %v219
    %243 = vmatprep.subr.bf16.mxu0 0
    %244 = vmatpush1.bf16.msra.mxu0 %v220
    %245 = vmatprep.subr.bf16.mxu0 0
    %246 = vmatpush1.bf16.msra.mxu0 0
    %247 = vmatprep.subr.bf16.mxu0 0
    %248 = vmatpush1.bf16.msra.mxu0 0
    %249 = vmatprep.subr.bf16.mxu0 0
    %250 = vmatpush1.bf16.msra.mxu0 0
    %251 = vmatprep.subr.bf16.mxu0 0
    %252 = vmatpush1.bf16.msra.mxu0 0
    %253 = vmatprep.subr.bf16.mxu0 0
    %254 = vmatpush1.bf16.msra.mxu0 0
    %255 = vmatprep.subr.bf16.mxu0 0
    %256 = vmatpush1.bf16.msra.mxu0 0
    %257 = vmatprep.subr.bf16.mxu0 0
    %258 = vmatpush1.bf16.msra.mxu0 0
    %259 = vmatprep.subr.bf16.mxu0 0
    %260 = vmatpush1.bf16.msra.mxu0 0
    %261 = vmatprep.mubr.bf16.mxu0 0
    %262 = vmatmul.mubr.bf16.gmra.mrb[0].mxu0 %v157
    %v263 = vpop.f32.mrb[0].mxu0
    %v264 = vadd.f32 %v179, %v263
    %v265 = vpop.f32.mrb[0].mxu0
    %v266 = vpop.f32.mrb[0].mxu0
    %v267 = vadd.f32 %v179, %v266
    %v268 = vpop.f32.mrb[0].mxu0
    %269 = vdwg.mxu0
    %v270 = vtanh.pop %v264
    %v271 = vtanh.pop %v267
    %v272 = vpack.c.bf16 %v271, %v270
    %v273 = vld [vmem:[%s6] sm:$0xff]
    %v274 = vld [vmem:[%s6 + $0x8] sm:$0xff]
    %v275 = vld [vmem:[%s6 + $0x10] sm:$0xff]
    %v276 = vld [vmem:[%s6 + $0x18] sm:$0xff]
    %v277 = vld [vmem:[%s6 + $0x20] sm:$0xff]
    %v278 = vld [vmem:[%s6 + $0x28] sm:$0xff]
    %v279 = vld [vmem:[%s6 + $0x30] sm:$0xff]
    %v280 = vld [vmem:[%s6 + $0x38] sm:$0xff]
    %v281 = vld [vmem:[%s6 + $0x40] sm:$0xff]
    %v282 = vld [vmem:[%s6 + $0x48] sm:$0xff]
    %v283 = vld [vmem:[%s6 + $0x50] sm:$0xff]
    %v284 = vld [vmem:[%s6 + $0x58] sm:$0xff]
    %v285 = vld [vmem:[%s6 + $0x60] sm:$0xff]
    %v286 = vld [vmem:[%s6 + $0x68] sm:$0xff]
    %v287 = vld [vmem:[%s6 + $0x70] sm:$0xff]
    %v288 = vld [vmem:[%s6 + $0x78] sm:$0xff]
    %v289 = vld [vmem:[%s7] sm:$0x3]
    %v291 = vlaneseq
    %v292 = vshrl.u32 %v291, 7
    %v293 = vsub.s32 0, %v292
    %v294 = vrot.slane %v289, %v293
    %v295 = vlaneseq
    %v296 = vshrl.u32 %v295, 7
    %v297 = vsub.s32 1, %v296
    %v298 = vrot.slane %v289, %v297
    %v317 = vunpack.c.l.b16 %v273
    %v318 = vunpack.c.h.b16 %v273
    %v319 = vunpack.c.l.b16 %v274
    %v320 = vunpack.c.h.b16 %v274
    %v321 = vunpack.c.l.b16 %v275
    %v322 = vunpack.c.h.b16 %v275
    %v323 = vunpack.c.l.b16 %v276
    %v324 = vunpack.c.h.b16 %v276
    %v325 = vunpack.c.l.b16 %v277
    %v326 = vunpack.c.h.b16 %v277
    %v327 = vunpack.c.l.b16 %v278
    %v328 = vunpack.c.h.b16 %v278
    %v329 = vunpack.c.l.b16 %v279
    %v330 = vunpack.c.h.b16 %v279
    %v331 = vunpack.c.l.b16 %v280
    %v332 = vunpack.c.h.b16 %v280
    %v333 = vunpack.c.l.b16 %v281
    %v334 = vunpack.c.h.b16 %v281
    %v335 = vunpack.c.l.b16 %v282
    %v336 = vunpack.c.h.b16 %v282
    %v337 = vunpack.c.l.b16 %v283
    %v338 = vunpack.c.h.b16 %v283
    %v339 = vunpack.c.l.b16 %v284
    %v340 = vunpack.c.h.b16 %v284
    %v341 = vunpack.c.l.b16 %v285
    %v342 = vunpack.c.h.b16 %v285
    %v343 = vunpack.c.l.b16 %v286
    %v344 = vunpack.c.h.b16 %v286
    %v345 = vunpack.c.l.b16 %v287
    %v346 = vunpack.c.h.b16 %v287
    %v347 = vunpack.c.l.b16 %v288
    %v348 = vunpack.c.h.b16 %v288
    %v349 = vpack.c.b16 %v319, %v317
    %v350 = vpack.c.b16 %v320, %v318
    %v351 = vpack.c.b16 %v323, %v321
    %v352 = vpack.c.b16 %v324, %v322
    %v353 = vpack.c.b16 %v327, %v325
    %v354 = vpack.c.b16 %v328, %v326
    %v355 = vpack.c.b16 %v331, %v329
    %v356 = vpack.c.b16 %v332, %v330
    %v357 = vpack.c.b16 %v335, %v333
    %v358 = vpack.c.b16 %v336, %v334
    %v359 = vpack.c.b16 %v339, %v337
    %v360 = vpack.c.b16 %v340, %v338
    %v361 = vpack.c.b16 %v343, %v341
    %v362 = vpack.c.b16 %v344, %v342
    %v363 = vpack.c.b16 %v347, %v345
    %v364 = vpack.c.b16 %v348, %v346
    %381 = vmatprep.subr.bf16.mxu0 %v350
    %382 = vmatpush1.bf16.msra.mxu0 %v349
    %383 = vmatprep.subr.bf16.mxu0 %v352
    %384 = vmatpush1.bf16.msra.mxu0 %v351
    %385 = vmatprep.subr.bf16.mxu0 %v354
    %386 = vmatpush1.bf16.msra.mxu0 %v353
    %387 = vmatprep.subr.bf16.mxu0 %v356
    %388 = vmatpush1.bf16.msra.mxu0 %v355
    %389 = vmatprep.subr.bf16.mxu0 %v358
    %390 = vmatpush1.bf16.msra.mxu0 %v357
    %391 = vmatprep.subr.bf16.mxu0 %v360
    %392 = vmatpush1.bf16.msra.mxu0 %v359
    %393 = vmatprep.subr.bf16.mxu0 %v362
    %394 = vmatpush1.bf16.msra.mxu0 %v361
    %395 = vmatprep.subr.bf16.mxu0 %v364
    %396 = vmatpush1.bf16.msra.mxu0 %v363
    %397 = vmatprep.subr.bf16.mxu0 0
    %398 = vmatpush1.bf16.msra.mxu0 0
    %399 = vmatprep.subr.bf16.mxu0 0
    %400 = vmatpush1.bf16.msra.mxu0 0
    %401 = vmatprep.subr.bf16.mxu0 0
    %402 = vmatpush1.bf16.msra.mxu0 0
    %403 = vmatprep.subr.bf16.mxu0 0
    %404 = vmatpush1.bf16.msra.mxu0 0
    %405 = vmatprep.subr.bf16.mxu0 0
    %406 = vmatpush1.bf16.msra.mxu0 0
    %407 = vmatprep.subr.bf16.mxu0 0
    %408 = vmatpush1.bf16.msra.mxu0 0
    %409 = vmatprep.subr.bf16.mxu0 0
    %410 = vmatpush1.bf16.msra.mxu0 0
    %411 = vmatprep.subr.bf16.mxu0 0
    %412 = vmatpush1.bf16.msra.mxu0 0
    %413 = vmatprep.mubr.bf16.mxu0 0
    %414 = vmatmul.mubr.bf16.gmra.mrb[0].mxu0 %v272
    %v415 = vpop.f32.mrb[0].mxu0
    %v416 = vadd.f32 %v294, %v415
    %v417 = vpop.f32.mrb[0].mxu0
    %v418 = vadd.f32 %v298, %v417
    %v419 = vpop.f32.mrb[0].mxu0
    %v420 = vadd.f32 %v294, %v419
    %v421 = vpop.f32.mrb[0].mxu0
    %v422 = vadd.f32 %v298, %v421
    %423 = vdwg.mxu0
    %v424 = vld [vmem:[%s1] sm:$0xff]
    %v425 = vld [vmem:[%s1 + $0x8] sm:$0xff]
    %vm426 = vcmp.gt.f32.partialorder %v424, 0.5
    %vm427 = vcmp.gt.f32.partialorder %v425, 0.5
    %v428 = vsel %vm426, 1, 0
    %v429 = vsel %vm427, 1, 0
    %430 = vset.pattern.permute.xlu0 0
    %431 = vperm.xlu0 %430, %v428
    %v432 = vpop.permute.xlu0 %431
    %433 = vset.pattern.permute.xlu0 0
    %434 = vperm.xlu0 %433, %v429
    %v435 = vpop.permute.xlu0 %434
    %vm436 = vcmp.eq.s32.totalorder %v432, 1
    %vm437 = vcmp.eq.s32.totalorder %v435, 1
    %v438 = vsel %vm436, %v418, %v416
    %v439 = vsel %vm437, %v422, %v420
    %440 = vst [vmem:[%s8] sm:$0xff] %v438
    %441 = vst [vmem:[%s8 + $0x8] sm:$0xff] %v439
    // Predicated region
    $region42: #{delta_encoder_forward.1} parent=1 // pred_check
      _
    $region43: #{delta_encoder_forward.1} parent=1 // pred_check_branch
      %443 = sbr.rel (0) target = $region45
    $region44: #{delta_encoder_forward.1} parent=1 // pred_region
      _
    $region45: #{delta_encoder_forward.1} parent=1 // pred_fallthru
      _
    // Predicated region
    $region46: #{delta_encoder_forward.1} parent=1 // pred_check
      _
    $region47: #{delta_encoder_forward.1} parent=1 // pred_check_branch
      %445 = sbr.rel (0) target = $region49
    $region48: #{delta_encoder_forward.1} parent=1 // pred_region
      _
    $region49: #{delta_encoder_forward.1} parent=1 // pred_fallthru
      _
    %446 = vsyncpa [#allocation3], 1
    %447 = vsyncpa [#allocation5], 1

</llo_original>
